<compile_context>
chip_gen: v5e
topology: v5e:2x2
jax: 0.10.0
libtpu: 0.0.40
codegen_flags: <defaults>
</compile_context>

<pallas_src>
import jax
import jax.numpy as jnp
from jax.experimental import pallas as pl
from jax.experimental.pallas import tpu as pltpu


_LANE = 128
# 8192 * 32 * 4 B = 1 MiB per x buffer -> 2 MiB double-buffered; safe on v5e/v6e/v7x.
_MAX_TB = 8192


def _linear_vpu_kernel(xT_ref, w_ref, b_ref, o_ref):
    """One batch tile of y = x @ W^T + b, computed without the MXU.

    xT_ref: (32, TB) f32 -- inputs, batch on the lane axis
    w_ref:  (32, 1)  f32 -- weight column (pre-transposed in the wrapper)
    b_ref:  (1,)     f32 -- bias scalar in SMEM
    o_ref:  (1, TB)  f32 -- lane-dense output row for this tile
    """
    prod = xT_ref[...] * w_ref[...]                  # VPU broadcast multiply
    acc = jnp.sum(prod, axis=0, keepdims=True)       # XLU sublane reduce -> (1, TB)
    o_ref[...] = (acc + b_ref[0]).astype(o_ref.dtype)


def regression_model_forward(x, weight, bias):
    """Forward of RegressionModel (nn.Linear(32, 1)).

    x:      (B, 32) float32
    weight: (1, 32) float32  (PyTorch layout: out_features x in_features)
    bias:   (1,)    float32
    returns (B, 1)  float32
    """
    B, K = x.shape
    assert weight.shape[1] == K and weight.shape[0] == 1

    # Layout plumbing in the wrapper: batch -> lane axis, weight -> column.
    xT = x.T                              # (K, B)
    w_col = weight.reshape(K, 1)          # (K, 1), no in-kernel relayout
    b_smem = bias.reshape(1)              # (1,) scalar for SMEM

    # Pad batch to a lane multiple, pick tile, pad to a tile multiple (ragged tail).
    b_pad = max(_LANE, ((B + _LANE - 1) // _LANE) * _LANE)
    tb = min(_MAX_TB, b_pad)
    b_pad = ((b_pad + tb - 1) // tb) * tb
    if b_pad != B:
        xT = jnp.pad(xT, ((0, 0), (0, b_pad - B)))
    grid = (b_pad // tb,)

    out = pl.pallas_call(
        _linear_vpu_kernel,
        out_shape=jax.ShapeDtypeStruct((1, b_pad), x.dtype),
        grid_spec=pltpu.PrefetchScalarGridSpec(
            num_scalar_prefetch=0,
            grid=grid,
            in_specs=[
                pl.BlockSpec((K, tb), lambda i: (0, i)),             # x tile (pipelined)
                pl.BlockSpec((K, 1), lambda i: (0, 0)),              # weight stays resident
                pl.BlockSpec(memory_space=pltpu.MemorySpace.SMEM),   # bias scalar
            ],
            out_specs=pl.BlockSpec((1, tb), lambda i: (0, i)),       # lane-dense output
        ),
        compiler_params=pltpu.CompilerParams(
            dimension_semantics=("parallel",),   # independent tiles; 2 TCs on v7x
        ),
        cost_estimate=pl.CostEstimate(
            flops=2 * B * K,
            transcendentals=0,
            bytes_accessed=B * K * 4 + B * 4 + K * 4 + 4,
        ),
    )(xT, w_col, b_smem)

    # (1, B_pad) -> (B, 1)
    return out[0, :B].reshape(B, 1)


if __name__ == "__main__":
    key = jax.random.PRNGKey(0)
    kx, kw, kb = jax.random.split(key, 3)

    B, IN, OUT = 8, 32, 1

    # Deterministic parameter init (mimics nn.Linear default uniform bound 1/sqrt(in)).
    bound = 1.0 / jnp.sqrt(jnp.float32(IN))
    weight = jax.random.uniform(kw, (OUT, IN), jnp.float32, -bound, bound)
    bias = jax.random.uniform(kb, (OUT,), jnp.float32, -bound, bound)

    x = jax.random.normal(kx, (B, IN), jnp.float32)

    y = regression_model_forward(x, weight, bias)
    y = jax.block_until_ready(y)

    # Reference check in plain JAX.
    y_ref = x @ weight.T + bias
    assert y.shape == (B, OUT)
    assert jnp.allclose(y, y_ref, atol=1e-5, rtol=1e-5)

    print("KERNEL_OK")
</pallas_src>

<mosaic_0001>
module attributes {stable_mosaic.version = 11 : i64} {
  func.func @_linear_vpu_kernel(%arg0: i32, %arg1: memref<32x128xf32, #tpu.memory_space<vmem>>, %arg2: memref<32x1xf32, #tpu.memory_space<vmem>>, %arg3: memref<1xf32, #tpu.memory_space<smem>>, %arg4: memref<1x128xf32, #tpu.memory_space<vmem>>) attributes {dimension_semantics = [#tpu.dimension_semantics<parallel>], iteration_bounds = array<i64: 1>, scalar_prefetch = 0 : i64, scratch_operands = 0 : i64, tpu.core_type = #tpu.core_type<tc>, window_params = [{transform_indices = @transform_0, window_bounds = array<i64: 32, 128>}, {pipeline_mode = #tpu.pipeline_mode<synchronous>, transform_indices = @transform_1, window_bounds = array<i64: 32, 1>}, {transform_indices = @transform_2, window_bounds = array<i64: 1>}, {transform_indices = @transform_3, window_bounds = array<i64: 1, 128>}]} {
    %c0 = arith.constant 0 : index
    %c0_0 = arith.constant 0 : index
    %0 = vector.load %arg1[%c0, %c0_0] : memref<32x128xf32, #tpu.memory_space<vmem>>, vector<32x128xf32>
    %c0_1 = arith.constant 0 : index
    %c0_2 = arith.constant 0 : index
    %1 = vector.load %arg2[%c0_1, %c0_2] : memref<32x1xf32, #tpu.memory_space<vmem>>, vector<32x1xf32>
    %2 = vector.broadcast %1 : vector<32x1xf32> to vector<32x128xf32>
    %3 = arith.mulf %0, %2 : vector<32x128xf32>
    %cst = arith.constant dense<0.000000e+00> : vector<128xf32>
    %4 = vector.multi_reduction <add>, %3, %cst [0] : vector<32x128xf32> to vector<128xf32>
    %5 = vector.shape_cast %4 : vector<128xf32> to vector<1x128xf32>
    %c0_3 = arith.constant 0 : index
    %6 = memref.load %arg3[%c0_3] : memref<1xf32, #tpu.memory_space<smem>>
    %7 = vector.broadcast %6 : f32 to vector<1x128xf32>
    %8 = arith.addf %5, %7 : vector<1x128xf32>
    %c0_4 = arith.constant 0 : index
    %c0_5 = arith.constant 0 : index
    %9 = vector.load %arg4[%c0_4, %c0_5] : memref<1x128xf32, #tpu.memory_space<vmem>>, vector<1x128xf32>
    tpu.vector_store %arg4[%c0_4, %c0_5], %8 {strides = array<i32>} : memref<1x128xf32, #tpu.memory_space<vmem>>, vector<1x128xf32>,
    return
  }
  func.func @transform_0(%arg0: i32) -> (i32, i32) {
    %c0_i32 = arith.constant 0 : i32
    %c0_i32_0 = arith.constant 0 : i32
    return %c0_i32, %arg0 : i32, i32
  }
  func.func @transform_1(%arg0: i32) -> (i32, i32) {
    %c0_i32 = arith.constant 0 : i32
    %c0_i32_0 = arith.constant 0 : i32
    %c0_i32_1 = arith.constant 0 : i32
    return %c0_i32, %c0_i32_0 : i32, i32
  }
  func.func @transform_2(%arg0: i32) -> i32 {
    %c0_i32 = arith.constant 0 : i32
    %c0_i32_0 = arith.constant 0 : i32
    return %c0_i32 : i32
  }
  func.func @transform_3(%arg0: i32) -> (i32, i32) {
    %c0_i32 = arith.constant 0 : i32
    %c0_i32_0 = arith.constant 0 : i32
    return %c0_i32, %arg0 : i32, i32
  }
}

</mosaic_0001>

<llo_original>
// kernel: tpu_custom_call.1
$region0: #{tpu_custom_call.1}
  #allocation0 [shape = 'u32[]', space=smem, size = 0x4, offset = 0x4, fixed_abs, tag = 'smem constant byte address 0x4 - core index']
  #allocation1 [shape = 'u32[72,128]{1,0:T(1,128)}', space=vmem, size = 0x9000, scoped, tag = 'internal scratch']
  #allocation2 [shape = 'f32[1]{0:T(128)S(6)}', space=smem, size = 0x200, scoped, tag = 'scoped memory for tpu_custom_call.1']
  %s0 = inlined_call_operand.vmem [shape: f32[32,128], index: 0, kind: input, shape index: {}]
  %s1 = inlined_call_operand.vmem [shape: f32[32,1], index: 1, kind: input, shape index: {}]
  %s2 = inlined_call_operand.<no memory space> [shape: f32[1], index: 2, kind: input, shape index: {}]
  %s3 = inlined_call_operand.hbm [shape: f32[1,128], index: 3, kind: output, shape index: {}]
  %s4 = sld [smem:[#allocation0]]
  $region22: #{tpu_custom_call.1} parent=0
    _
  %s6 = ssub.s32 1, %s4
  %s7 = scalar_select 0, %s6, %s4
  %8 = sst [smem:[#allocation2]] %s2
  $region1: #{tpu_custom_call.1} parent=0
    #allocation3 [shape = 'u8[512]{0}', space=vmem, size = 0x400, scoped, tag = 'output window, operand 0, single buffered']
    #allocation4 [shape = 's32[1]{0}', space=sflag, size = 0x4, scoped, tag = 'scoped memory for tpu_custom_call.1']
    %9 = vsyncpa [#allocation4], 0
    // Predicated region
    $region2: #{tpu_custom_call.1} parent=1 // pred_check
      _
    $region3: #{tpu_custom_call.1} parent=1 // pred_check_branch
      %11 = sbr.rel (0) target = $region5
    $region4: #{tpu_custom_call.1} parent=1 // pred_region
      _
    $region5: #{tpu_custom_call.1} parent=1 // pred_fallthru
      _
    // Predicated region
    $region6: #{tpu_custom_call.1} parent=1 // pred_check
      _
    $region7: #{tpu_custom_call.1} parent=1 // pred_check_branch
      %13 = sbr.rel (0) target = $region9
    $region8: #{tpu_custom_call.1} parent=1 // pred_region
      _
    $region9: #{tpu_custom_call.1} parent=1 // pred_fallthru
      _
    // Predicated region
    $region10: #{tpu_custom_call.1} parent=1 // pred_check
      _
    $region11: #{tpu_custom_call.1} parent=1 // pred_check_branch
      %15 = sbr.rel (0) target = $region13
    $region12: #{tpu_custom_call.1} parent=1 // pred_region
      _
    $region13: #{tpu_custom_call.1} parent=1 // pred_fallthru
      _
    %v16 = vld [vmem:[%s0] sm:$0xff]
    %v17 = vld [vmem:[%s0 + $0x8] sm:$0xff]
    %v18 = vld [vmem:[%s0 + $0x10] sm:$0xff]
    %v19 = vld [vmem:[%s0 + $0x18] sm:$0xff]
    %v20 = vld [vmem:[%s1] sm:$0xff]
    %v21 = vld [vmem:[%s1 + $0x8] sm:$0xff]
    %v22 = vld [vmem:[%s1 + $0x10] sm:$0xff]
    %v23 = vld [vmem:[%s1 + $0x18] sm:$0xff]
    %25 = vset.pattern.permute.xlu0 0
    %26 = vperm.xlu0 %25, %v20
    %v27 = vpop.permute.xlu0 %26
    %30 = vset.pattern.permute.xlu0 0
    %31 = vperm.xlu0 %30, %v21
    %v32 = vpop.permute.xlu0 %31
    %35 = vset.pattern.permute.xlu0 0
    %36 = vperm.xlu0 %35, %v22
    %v37 = vpop.permute.xlu0 %36
    %40 = vset.pattern.permute.xlu0 0
    %41 = vperm.xlu0 %40, %v23
    %v42 = vpop.permute.xlu0 %41
    %v44 = vmul.f32 %v16, %v27
    %v45 = vmul.f32 %v17, %v32
    %v46 = vmul.f32 %v18, %v37
    %v47 = vmul.f32 %v19, %v42
    %v48 = vadd.f32 %v44, %v45
    %v49 = vadd.f32 %v48, %v46
    %v50 = vadd.f32 %v49, %v47
    %v51 = vrot.slane %v50, 4
    %v52 = vadd.f32 %v50, %v51
    %v53 = vrot.slane %v52, 2
    %v54 = vadd.f32 %v52, %v53
    %v55 = vrot.slane %v54, 1
    %v56 = vadd.f32 %v54, %v55
    %s57 = sld [smem:[#allocation2]]
    %v58 = vstv %s57
    %v59 = vadd.f32 %v56, %v58
    %60 = vst [vmem:[#allocation3] sm:$0x1] %v59
    // Predicated region
    $region14: #{tpu_custom_call.1} parent=1 // pred_check
      _
    $region15: #{tpu_custom_call.1} parent=1 // pred_check_branch
      %62 = sbr.rel (0) target = $region17
    $region16: #{tpu_custom_call.1} parent=1 // pred_region
      %64 = vsyncadd [#allocation4], 0
      %s66 = sshll.u32 [#allocation3], 4
      %s67 = int_to_ptr.vmem [resolvable:$true] %s66
      %s68 = sshll.u32 %s3, 4
      %s69 = int_to_ptr.hbm [resolvable:$true] %s68
      %71 = dma.vmem_to_hbm [thread:$0]  %s67, 16, %s69, [#allocation4]
    $region17: #{tpu_custom_call.1} parent=1 // pred_fallthru
      _
    // Predicated region
    $region18: #{tpu_custom_call.1} parent=1 // pred_check
      _
    $region19: #{tpu_custom_call.1} parent=1 // pred_check_branch
      %73 = sbr.rel (0) target = $region21
    $region20: #{tpu_custom_call.1} parent=1 // pred_region
      %75 = dma.done [#allocation4], 16
    $region21: #{tpu_custom_call.1} parent=1 // pred_fallthru
      _
    %76 = vsyncpa [#allocation4], 1

</llo_original>
